<compile_context>
chip_gen: v6e
topology: v6e:2x2x1
jax: 0.10.0
libtpu: 0.0.40
codegen_flags: <defaults>
</compile_context>

<pallas_src>
import jax
import jax.numpy as jnp
from jax.experimental import pallas as pl
from jax.experimental.pallas import tpu as pltpu


def se_attention_kernel(x_ref, w1_ref, b1_ref, w2_ref, b2_ref, out_ref):
    # x_ref  : (TB, C)
    # w1_ref : (C, H)    b1_ref : (1, H)  f32
    # w2_ref : (H, C)    b2_ref : (1, C)  f32
    # out_ref: (TB, C)
    x = x_ref[...]

    # fc1 + ReLU: MXU matmul with f32 accumulation, bias add + ReLU on the VPU.
    h = jnp.dot(x, w1_ref[...], preferred_element_type=jnp.float32) + b1_ref[...]
    h = jnp.maximum(h, 0.0)

    # fc2 + Sigmoid: cast h to the weight dtype so bf16 weights keep the native
    # MXU path; accumulate f32, sigmoid (exp) runs on the EUP in f32.
    y = jnp.dot(h.astype(w2_ref.dtype), w2_ref[...],
                preferred_element_type=jnp.float32) + b2_ref[...]
    out_ref[...] = jax.nn.sigmoid(y).astype(out_ref.dtype)


def _vmem_budget_bytes():
    """~75% of physical VMEM (generation-aware); conservative fallback 48 MiB."""
    try:
        cap = pltpu.get_tpu_info().vmem_capacity_bytes
        if cap:
            return int(cap) * 3 // 4
    except Exception:
        pass
    return 48 * 1024 * 1024


def _pick_batch_tile(B, C, H, x_bytes, out_bytes, w_bytes, vmem_budget):
    """Largest batch tile that fits the VMEM budget (x/out double-buffered)."""
    # Resident operands (weights + f32 biases). Counted double-buffered for
    # headroom even though we request Buffered(1).
    resident = 2 * (2 * C * H * w_bytes) + 2 * 4 * (H + C)
    # Pipelined operands: x tile + out tile, double-buffered.
    per_row = 2 * C * (x_bytes + out_bytes)
    avail = max(vmem_budget - resident, per_row * 8)
    max_rows = max(8, avail // per_row)

    if B <= max_rows:
        # Whole batch fits: run a single grid step (no per-step overhead on the
        # single-TC v5e/v6e).  For very large batches two steps are free and
        # let v7x shard the parallel axis across both TensorCores.
        if B >= 1024 and B % 16 == 0:
            return B // 2
        return B

    tile = min(max_rows, B)
    tile = max(8, (tile // 8) * 8)
    while tile > 8 and B % tile != 0:
        tile -= 8
    if B % tile != 0:
        # B > 8 but not a multiple of 8: fall back to one unpipelined (B, C)
        # block.  Correct, just not pipelined.
        tile = B
    return tile


def se_attention_forward(x, w1, b1, w2, b2, *, weights_dtype=None, batch_tile=None):
    """x: (B, C); w1: (H, C); b1: (H,); w2: (C, H); b2: (C,) with H = C // 4.

    weights_dtype=jnp.bfloat16 halves HBM/VMEM bytes for x and the weights
    (recommended on v6e/v7x); accumulation and elementwise math stay f32.
    """
    B, C = x.shape
    H = w1.shape[0]
    assert w1.shape == (H, C) and w2.shape == (C, H)
    assert b1.shape == (H,) and b2.shape == (C,)

    out_dtype = x.dtype
    op_dtype = jnp.dtype(weights_dtype) if weights_dtype is not None else jnp.dtype(jnp.float32)

    # One-time glue in plain JAX (outside the kernel): transpose weights,
    # row-shape the biases, cast the matmul operands.
    w1_t = w1.T.astype(op_dtype)                    # (C, H)
    w2_t = w2.T.astype(op_dtype)                    # (H, C)
    b1_row = b1.reshape(1, H).astype(jnp.float32)   # (1, H)
    b2_row = b2.reshape(1, C).astype(jnp.float32)   # (1, C)
    x_in = x.astype(op_dtype)

    x_bytes = jnp.dtype(op_dtype).itemsize
    out_bytes = jnp.dtype(out_dtype).itemsize
    w_bytes = x_bytes

    vmem_budget = _vmem_budget_bytes()
    if batch_tile is None:
        batch_tile = _pick_batch_tile(B, C, H, x_bytes, out_bytes, w_bytes, vmem_budget)
    assert B % batch_tile == 0
    grid = (B // batch_tile,)

    # VMEM footprint of this tiling: x/out tiles double-buffered + resident
    # weights (counted x2 for headroom) -> size the scoped limit to it so large
    # tiles are not rejected by the default (16/32 MiB) limit.
    footprint = (2 * batch_tile * C * (x_bytes + out_bytes)
                 + 2 * (2 * C * H * w_bytes + 4 * (H + C)))
    phys_cap = vmem_budget * 4 // 3
    vmem_limit = max(32 << 20, min(footprint * 5 // 4 + (2 << 20), phys_cap))
    vmem_limit = int(max(vmem_limit, footprint + (1 << 20)))

    cost = pl.CostEstimate(
        flops=4 * B * C * H,                 # two (B,C)x(C,H)-sized matmuls
        transcendentals=B * C,               # sigmoid
        bytes_accessed=B * C * (x_bytes + out_bytes) + 2 * C * H * w_bytes + 4 * (H + C),
    )

    def build_in_specs(single_buffer_resident):
        def resident(shape):
            if single_buffer_resident:
                # Constant index_map -> DMA'd once; single buffer frees VMEM
                # (matters most on v7x's 64 MiB/TC at large C).
                return pl.BlockSpec(shape, lambda i: (0, 0),
                                    pipeline_mode=pl.Buffered(buffer_count=1))
            return pl.BlockSpec(shape, lambda i: (0, 0))
        return [
            pl.BlockSpec((batch_tile, C), lambda i: (i, 0)),   # x tile (pipelined)
            resident((C, H)),                                  # W1^T (VMEM-resident)
            resident((1, H)),                                  # b1
            resident((H, C)),                                  # W2^T (VMEM-resident)
            resident((1, C)),                                  # b2
        ]

    def run(single_buffer_resident):
        return pl.pallas_call(
            se_attention_kernel,
            out_shape=jax.ShapeDtypeStruct((B, C), out_dtype),
            grid_spec=pl.GridSpec(
                grid=grid,
                in_specs=build_in_specs(single_buffer_resident),
                out_specs=pl.BlockSpec((batch_tile, C), lambda i: (i, 0)),
            ),
            compiler_params=pltpu.CompilerParams(
                dimension_semantics=("parallel",),
                vmem_limit_bytes=vmem_limit),
            cost_estimate=cost,
        )(x_in, w1_t, b1_row, w2_t, b2_row)

    try:
        return run(True)
    except Exception:
        # Older jax without BlockSpec.pipeline_mode / Buffered(1): retry with
        # default double-buffered resident operands (any unrelated error will
        # re-raise from the retry).
        return run(False)


def reference_forward(x, w1, b1, w2, b2):
    h = jax.nn.relu(x @ w1.T + b1)
    return jax.nn.sigmoid(h @ w2.T + b2)


if __name__ == "__main__":
    B, dim_size = 16, 32         # batch rows, channel (= dim_size in the module)
    C = dim_size
    H = C // 4                   # reduction = 4

    key = jax.random.PRNGKey(0)
    kx, kw1, kb1, kw2, kb2 = jax.random.split(key, 5)

    x = jax.random.normal(kx, (B, C), jnp.float32)

    # torch.nn.Linear default init: U(-1/sqrt(fan_in), 1/sqrt(fan_in))
    bound1 = 1.0 / (C ** 0.5)
    w1 = jax.random.uniform(kw1, (H, C), jnp.float32, -bound1, bound1)
    b1 = jax.random.uniform(kb1, (H,), jnp.float32, -bound1, bound1)
    bound2 = 1.0 / (H ** 0.5)
    w2 = jax.random.uniform(kw2, (C, H), jnp.float32, -bound2, bound2)
    b2 = jax.random.uniform(kb2, (C,), jnp.float32, -bound2, bound2)

    ref = reference_forward(x, w1, b1, w2, b2)

    # f32 path: exact match against the reference.
    out = jax.block_until_ready(se_attention_forward(x, w1, b1, w2, b2))
    assert out.shape == (B, C)
    assert jnp.allclose(out, ref, atol=1e-5, rtol=1e-5), "f32 mismatch vs reference"

    # bf16-operand path (HBM/VMEM-optimized, recommended on v6e/v7x):
    # f32 accumulation, looser tolerance for the bf16 operand rounding.
    out_bf16 = jax.block_until_ready(
        se_attention_forward(x, w1, b1, w2, b2, weights_dtype=jnp.bfloat16))
    assert out_bf16.shape == (B, C)
    assert jnp.allclose(out_bf16, ref, atol=3e-2, rtol=3e-2), "bf16 mismatch vs reference"

    print("KERNEL_OK")
</pallas_src>

<mosaic_0001>
module attributes {stable_mosaic.version = 11 : i64} {
  func.func @se_attention_kernel(%arg0: i32, %arg1: memref<16x32xf32, #tpu.memory_space<vmem>>, %arg2: memref<32x8xf32, #tpu.memory_space<vmem>>, %arg3: memref<1x8xf32, #tpu.memory_space<vmem>>, %arg4: memref<8x32xf32, #tpu.memory_space<vmem>>, %arg5: memref<1x32xf32, #tpu.memory_space<vmem>>, %arg6: memref<16x32xf32, #tpu.memory_space<vmem>>) attributes {dimension_semantics = [#tpu.dimension_semantics<parallel>], iteration_bounds = array<i64: 1>, scalar_prefetch = 0 : i64, scratch_operands = 0 : i64, tpu.core_type = #tpu.core_type<tc>, window_params = [{transform_indices = @transform_0, window_bounds = array<i64: 16, 32>}, {pipeline_mode = #tpu.pipeline_mode<synchronous>, transform_indices = @transform_1, window_bounds = array<i64: 32, 8>}, {pipeline_mode = #tpu.pipeline_mode<synchronous>, transform_indices = @transform_2, window_bounds = array<i64: 1, 8>}, {pipeline_mode = #tpu.pipeline_mode<synchronous>, transform_indices = @transform_3, window_bounds = array<i64: 8, 32>}, {pipeline_mode = #tpu.pipeline_mode<synchronous>, transform_indices = @transform_4, window_bounds = array<i64: 1, 32>}, {transform_indices = @transform_5, window_bounds = array<i64: 16, 32>}]} {
    %c0 = arith.constant 0 : index
    %c0_0 = arith.constant 0 : index
    %0 = vector.load %arg1[%c0, %c0_0] : memref<16x32xf32, #tpu.memory_space<vmem>>, vector<16x32xf32>
    %c0_1 = arith.constant 0 : index
    %c0_2 = arith.constant 0 : index
    %1 = vector.load %arg2[%c0_1, %c0_2] : memref<32x8xf32, #tpu.memory_space<vmem>>, vector<32x8xf32>
    %cst = arith.constant dense<0.000000e+00> : vector<16x8xf32>
    %2 = tpu.matmul %0, %1, %cst {dimension_numbers = #tpu.dot_dimension_numbers<[1], [0], [0], [1], [0, 0, 1, 1], [], []>} : vector<16x32xf32>, vector<32x8xf32>, vector<16x8xf32> -> vector<16x8xf32>
    %c0_3 = arith.constant 0 : index
    %c0_4 = arith.constant 0 : index
    %3 = vector.load %arg3[%c0_3, %c0_4] : memref<1x8xf32, #tpu.memory_space<vmem>>, vector<1x8xf32>
    %4 = vector.broadcast %3 : vector<1x8xf32> to vector<16x8xf32>
    %5 = arith.addf %2, %4 : vector<16x8xf32>
    %cst_5 = arith.constant 0.000000e+00 : f32
    %6 = vector.broadcast %cst_5 : f32 to vector<16x8xf32>
    %7 = arith.maximumf %5, %6 : vector<16x8xf32>
    %c0_6 = arith.constant 0 : index
    %c0_7 = arith.constant 0 : index
    %8 = vector.load %arg4[%c0_6, %c0_7] : memref<8x32xf32, #tpu.memory_space<vmem>>, vector<8x32xf32>
    %cst_8 = arith.constant dense<0.000000e+00> : vector<16x32xf32>
    %9 = tpu.matmul %7, %8, %cst_8 {dimension_numbers = #tpu.dot_dimension_numbers<[1], [0], [0], [1], [0, 0, 1, 1], [], []>} : vector<16x8xf32>, vector<8x32xf32>, vector<16x32xf32> -> vector<16x32xf32>
    %c0_9 = arith.constant 0 : index
    %c0_10 = arith.constant 0 : index
    %10 = vector.load %arg5[%c0_9, %c0_10] : memref<1x32xf32, #tpu.memory_space<vmem>>, vector<1x32xf32>
    %11 = vector.broadcast %10 : vector<1x32xf32> to vector<16x32xf32>
    %12 = arith.addf %9, %11 : vector<16x32xf32>
    %13 = arith.negf %12 : vector<16x32xf32>
    %14 = math.exp %13 : vector<16x32xf32>
    %cst_11 = arith.constant 1.000000e+00 : f32
    %15 = vector.broadcast %cst_11 : f32 to vector<16x32xf32>
    %16 = arith.addf %15, %14 : vector<16x32xf32>
    %17 = arith.divf %15, %16 : vector<16x32xf32>
    %c0_12 = arith.constant 0 : index
    %c0_13 = arith.constant 0 : index
    %18 = vector.load %arg6[%c0_12, %c0_13] : memref<16x32xf32, #tpu.memory_space<vmem>>, vector<16x32xf32>
    tpu.vector_store %arg6[%c0_12, %c0_13], %17 {strides = array<i32>} : memref<16x32xf32, #tpu.memory_space<vmem>>, vector<16x32xf32>,
    return
  }
  func.func @transform_0(%arg0: i32) -> (i32, i32) {
    %c0_i32 = arith.constant 0 : i32
    %c0_i32_0 = arith.constant 0 : i32
    return %arg0, %c0_i32 : i32, i32
  }
  func.func @transform_1(%arg0: i32) -> (i32, i32) {
    %c0_i32 = arith.constant 0 : i32
    %c0_i32_0 = arith.constant 0 : i32
    %c0_i32_1 = arith.constant 0 : i32
    return %c0_i32, %c0_i32_0 : i32, i32
  }
  func.func @transform_2(%arg0: i32) -> (i32, i32) {
    %c0_i32 = arith.constant 0 : i32
    %c0_i32_0 = arith.constant 0 : i32
    %c0_i32_1 = arith.constant 0 : i32
    return %c0_i32, %c0_i32_0 : i32, i32
  }
  func.func @transform_3(%arg0: i32) -> (i32, i32) {
    %c0_i32 = arith.constant 0 : i32
    %c0_i32_0 = arith.constant 0 : i32
    %c0_i32_1 = arith.constant 0 : i32
    return %c0_i32, %c0_i32_0 : i32, i32
  }
  func.func @transform_4(%arg0: i32) -> (i32, i32) {
    %c0_i32 = arith.constant 0 : i32
    %c0_i32_0 = arith.constant 0 : i32
    %c0_i32_1 = arith.constant 0 : i32
    return %c0_i32, %c0_i32_0 : i32, i32
  }
  func.func @transform_5(%arg0: i32) -> (i32, i32) {
    %c0_i32 = arith.constant 0 : i32
    %c0_i32_0 = arith.constant 0 : i32
    return %arg0, %c0_i32 : i32, i32
  }
}

module attributes {stable_mosaic.version = 11 : i64} {
  func.func @se_attention_kernel(%arg0: i32, %arg1: memref<16x32xf32, #tpu.memory_space<vmem>>, %arg2: memref<32x8xf32, #tpu.memory_space<vmem>>, %arg3: memref<1x8xf32, #tpu.memory_space<vmem>>, %arg4: memref<8x32xf32, #tpu.memory_space<vmem>>, %arg5: memref<1x32xf32, #tpu.memory_space<vmem>>, %arg6: memref<16x32xf32, #tpu.memory_space<vmem>>) attributes {dimension_semantics = [#tpu.dimension_semantics<parallel>], iteration_bounds = array<i64: 1>, scalar_prefetch = 0 : i64, scratch_operands = 0 : i64, tpu.core_type = #tpu.core_type<tc>, window_params = [{transform_indices = @transform_0, window_bounds = array<i64: 16, 32>}, {pipeline_mode = #tpu.pipeline_mode<synchronous>, transform_indices = @transform_1, window_bounds = array<i64: 32, 8>}, {pipeline_mode = #tpu.pipeline_mode<synchronous>, transform_indices = @transform_2, window_bounds = array<i64: 1, 8>}, {pipeline_mode = #tpu.pipeline_mode<synchronous>, transform_indices = @transform_3, window_bounds = array<i64: 8, 32>}, {pipeline_mode = #tpu.pipeline_mode<synchronous>, transform_indices = @transform_4, window_bounds = array<i64: 1, 32>}, {transform_indices = @transform_5, window_bounds = array<i64: 16, 32>}]} {
    %c0 = arith.constant 0 : index
    %c0_0 = arith.constant 0 : index
    %0 = vector.load %arg1[%c0, %c0_0] : memref<16x32xf32, #tpu.memory_space<vmem>>, vector<16x32xf32>
    %c0_1 = arith.constant 0 : index
    %c0_2 = arith.constant 0 : index
    %1 = vector.load %arg2[%c0_1, %c0_2] : memref<32x8xf32, #tpu.memory_space<vmem>>, vector<32x8xf32>
    %cst = arith.constant dense<0.000000e+00> : vector<16x8xf32>
    %2 = tpu.matmul %0, %1, %cst {dimension_numbers = #tpu.dot_dimension_numbers<[1], [0], [0], [1], [0, 0, 1, 1], [], []>} : vector<16x32xf32>, vector<32x8xf32>, vector<16x8xf32> -> vector<16x8xf32>
    %c0_3 = arith.constant 0 : index
    %c0_4 = arith.constant 0 : index
    %3 = vector.load %arg3[%c0_3, %c0_4] : memref<1x8xf32, #tpu.memory_space<vmem>>, vector<1x8xf32>
    %4 = vector.broadcast %3 : vector<1x8xf32> to vector<16x8xf32>
    %5 = arith.addf %2, %4 : vector<16x8xf32>
    %cst_5 = arith.constant 0.000000e+00 : f32
    %6 = vector.broadcast %cst_5 : f32 to vector<16x8xf32>
    %7 = arith.maximumf %5, %6 : vector<16x8xf32>
    %c0_6 = arith.constant 0 : index
    %c0_7 = arith.constant 0 : index
    %8 = vector.load %arg4[%c0_6, %c0_7] : memref<8x32xf32, #tpu.memory_space<vmem>>, vector<8x32xf32>
    %cst_8 = arith.constant dense<0.000000e+00> : vector<16x32xf32>
    %9 = tpu.matmul %7, %8, %cst_8 {dimension_numbers = #tpu.dot_dimension_numbers<[1], [0], [0], [1], [0, 0, 1, 1], [], []>} : vector<16x8xf32>, vector<8x32xf32>, vector<16x32xf32> -> vector<16x32xf32>
    %c0_9 = arith.constant 0 : index
    %c0_10 = arith.constant 0 : index
    %10 = vector.load %arg5[%c0_9, %c0_10] : memref<1x32xf32, #tpu.memory_space<vmem>>, vector<1x32xf32>
    %11 = vector.broadcast %10 : vector<1x32xf32> to vector<16x32xf32>
    %12 = arith.addf %9, %11 : vector<16x32xf32>
    %13 = arith.negf %12 : vector<16x32xf32>
    %14 = math.exp %13 : vector<16x32xf32>
    %cst_11 = arith.constant 1.000000e+00 : f32
    %15 = vector.broadcast %cst_11 : f32 to vector<16x32xf32>
    %16 = arith.addf %15, %14 : vector<16x32xf32>
    %17 = arith.divf %15, %16 : vector<16x32xf32>
    %c0_12 = arith.constant 0 : index
    %c0_13 = arith.constant 0 : index
    %18 = vector.load %arg6[%c0_12, %c0_13] : memref<16x32xf32, #tpu.memory_space<vmem>>, vector<16x32xf32>
    tpu.vector_store %arg6[%c0_12, %c0_13], %17 {strides = array<i32>} : memref<16x32xf32, #tpu.memory_space<vmem>>, vector<16x32xf32>,
    return
  }
  func.func @transform_0(%arg0: i32) -> (i32, i32) {
    %c0_i32 = arith.constant 0 : i32
    %c0_i32_0 = arith.constant 0 : i32
    return %arg0, %c0_i32 : i32, i32
  }
  func.func @transform_1(%arg0: i32) -> (i32, i32) {
    %c0_i32 = arith.constant 0 : i32
    %c0_i32_0 = arith.constant 0 : i32
    %c0_i32_1 = arith.constant 0 : i32
    return %c0_i32, %c0_i32_0 : i32, i32
  }
  func.func @transform_2(%arg0: i32) -> (i32, i32) {
    %c0_i32 = arith.constant 0 : i32
    %c0_i32_0 = arith.constant 0 : i32
    %c0_i32_1 = arith.constant 0 : i32
    return %c0_i32, %c0_i32_0 : i32, i32
  }
  func.func @transform_3(%arg0: i32) -> (i32, i32) {
    %c0_i32 = arith.constant 0 : i32
    %c0_i32_0 = arith.constant 0 : i32
    %c0_i32_1 = arith.constant 0 : i32
    return %c0_i32, %c0_i32_0 : i32, i32
  }
  func.func @transform_4(%arg0: i32) -> (i32, i32) {
    %c0_i32 = arith.constant 0 : i32
    %c0_i32_0 = arith.constant 0 : i32
    %c0_i32_1 = arith.constant 0 : i32
    return %c0_i32, %c0_i32_0 : i32, i32
  }
  func.func @transform_5(%arg0: i32) -> (i32, i32) {
    %c0_i32 = arith.constant 0 : i32
    %c0_i32_0 = arith.constant 0 : i32
    return %arg0, %c0_i32 : i32, i32
  }
}

</mosaic_0001>

<llo_original>
// kernel: tpu_custom_call.1
$region0: #{tpu_custom_call.1}
  #allocation0 [shape = 'u32[]', space=smem, size = 0x4, offset = 0x4, fixed_abs, tag = 'smem constant byte address 0x4 - core index']
  #allocation1 [shape = 'u32[144,128]{1,0:T(1,128)}', space=vmem, size = 0x12000, scoped, tag = 'internal scratch']
  %s0 = inlined_call_operand.vmem [shape: f32[16,32], index: 0, kind: input, shape index: {}]
  %s1 = inlined_call_operand.vmem [shape: f32[32,8], index: 1, kind: input, shape index: {}]
  %s2 = inlined_call_operand.vmem [shape: f32[1,8], index: 2, kind: input, shape index: {}]
  %s3 = inlined_call_operand.vmem [shape: f32[8,32], index: 3, kind: input, shape index: {}]
  %s4 = inlined_call_operand.vmem [shape: f32[1,32], index: 4, kind: input, shape index: {}]
  %s5 = inlined_call_operand.hbm [shape: f32[16,32], index: 5, kind: output, shape index: {}]
  %s6 = sld [smem:[#allocation0]]
  $region30: #{tpu_custom_call.1} parent=0
    _
  %s8 = ssub.s32 1, %s6
  %s9 = scalar_select 0, %s8, %s6
  $region1: #{tpu_custom_call.1} parent=0
    #allocation2 [shape = 'u8[8192]{0}', space=vmem, size = 0x2000, scoped, tag = 'output window, operand 0, single buffered']
    #allocation3 [shape = 's32[1]{0}', space=sflag, size = 0x4, scoped, tag = 'scoped memory for tpu_custom_call.1']
    %10 = vsyncpa [#allocation3], 0
    // Predicated region
    $region2: #{tpu_custom_call.1} parent=1 // pred_check
      _
    $region3: #{tpu_custom_call.1} parent=1 // pred_check_branch
      %12 = sbr.rel (0) target = $region5
    $region4: #{tpu_custom_call.1} parent=1 // pred_region
      _
    $region5: #{tpu_custom_call.1} parent=1 // pred_fallthru
      _
    // Predicated region
    $region6: #{tpu_custom_call.1} parent=1 // pred_check
      _
    $region7: #{tpu_custom_call.1} parent=1 // pred_check_branch
      %14 = sbr.rel (0) target = $region9
    $region8: #{tpu_custom_call.1} parent=1 // pred_region
      _
    $region9: #{tpu_custom_call.1} parent=1 // pred_fallthru
      _
    // Predicated region
    $region10: #{tpu_custom_call.1} parent=1 // pred_check
      _
    $region11: #{tpu_custom_call.1} parent=1 // pred_check_branch
      %16 = sbr.rel (0) target = $region13
    $region12: #{tpu_custom_call.1} parent=1 // pred_region
      _
    $region13: #{tpu_custom_call.1} parent=1 // pred_fallthru
      _
    // Predicated region
    $region14: #{tpu_custom_call.1} parent=1 // pred_check
      _
    $region15: #{tpu_custom_call.1} parent=1 // pred_check_branch
      %18 = sbr.rel (0) target = $region17
    $region16: #{tpu_custom_call.1} parent=1 // pred_region
      _
    $region17: #{tpu_custom_call.1} parent=1 // pred_fallthru
      _
    // Predicated region
    $region18: #{tpu_custom_call.1} parent=1 // pred_check
      _
    $region19: #{tpu_custom_call.1} parent=1 // pred_check_branch
      %20 = sbr.rel (0) target = $region21
    $region20: #{tpu_custom_call.1} parent=1 // pred_region
      _
    $region21: #{tpu_custom_call.1} parent=1 // pred_fallthru
      _
    %v21 = vld [vmem:[%s0] sm:$0xff]
    %v22 = vld [vmem:[%s0 + $0x8] sm:$0xff]
    %v23 = vld [vmem:[%s1] sm:$0xff]
    %v24 = vld [vmem:[%s1 + $0x8] sm:$0xff]
    %v25 = vld [vmem:[%s1 + $0x10] sm:$0xff]
    %v26 = vld [vmem:[%s1 + $0x18] sm:$0xff]
    %v27 = vld [vmem:[%s2] sm:$0x1]
    %v29 = vlaneseq
    %v30 = vshrl.u32 %v29, 7
    %v31 = vsub.s32 0, %v30
    %v32 = vrot.slane %v27, %v31
    %vm34 = vcmask 261120
    %v36 = vsel %vm34, %v21, 0
    %v39 = vsel %vm34, %v22, 0
    %41 = vmatprep.subr.mxu0 0.0
    %42 = vmatpush1.msra.mxu0 0.0
    %43 = vmatprep.subr.mxu0 0.0
    %44 = vmatpush1.msra.mxu0 0.0
    %45 = vmatprep.subr.mxu0 0.0
    %46 = vmatpush1.msra.mxu0 0.0
    %47 = vmatprep.subr.mxu0 0.0
    %48 = vmatpush1.msra.mxu0 0.0
    %49 = vmatprep.subr.mxu0 0.0
    %50 = vmatpush1.msra.mxu0 0.0
    %51 = vmatprep.subr.mxu0 0.0
    %52 = vmatpush1.msra.mxu0 0.0
    %53 = vmatprep.subr.mxu0 0.0
    %54 = vmatpush1.msra.mxu0 0.0
    %55 = vmatprep.subr.mxu0 0.0
    %56 = vmatpush1.msra.mxu0 0.0
    %57 = vmatprep.subr.mxu0 0.0
    %58 = vmatpush1.msra.mxu0 0.0
    %59 = vmatprep.subr.mxu0 0.0
    %60 = vmatpush1.msra.mxu0 0.0
    %61 = vmatprep.subr.mxu0 0.0
    %62 = vmatpush1.msra.mxu0 0.0
    %63 = vmatprep.subr.mxu0 0.0
    %64 = vmatpush1.msra.mxu0 0.0
    %65 = vmatprep.subr.mxu0 0.0
    %66 = vmatpush1.msra.mxu0 %v26
    %67 = vmatprep.subr.mxu0 0.0
    %68 = vmatpush1.msra.mxu0 %v25
    %69 = vmatprep.subr.mxu0 0.0
    %70 = vmatpush1.msra.mxu0 %v24
    %71 = vmatprep.subr.mxu0 0.0
    %72 = vmatpush1.msra.mxu0 %v23
    %73 = vmatprep.subr.mxu0 0.0
    %74 = vmatpush2.msra.mxu0 0.0
    %75 = vmatprep.subr.mxu0 0.0
    %76 = vmatpush2.msra.mxu0 0.0
    %77 = vmatprep.subr.mxu0 0.0
    %78 = vmatpush2.msra.mxu0 0.0
    %79 = vmatprep.subr.mxu0 0.0
    %80 = vmatpush2.msra.mxu0 0.0
    %81 = vmatprep.subr.mxu0 0.0
    %82 = vmatpush2.msra.mxu0 0.0
    %83 = vmatprep.subr.mxu0 0.0
    %84 = vmatpush2.msra.mxu0 0.0
    %85 = vmatprep.subr.mxu0 0.0
    %86 = vmatpush2.msra.mxu0 0.0
    %87 = vmatprep.subr.mxu0 0.0
    %88 = vmatpush2.msra.mxu0 0.0
    %89 = vmatprep.subr.mxu0 0.0
    %90 = vmatpush2.msra.mxu0 0.0
    %91 = vmatprep.subr.mxu0 0.0
    %92 = vmatpush2.msra.mxu0 0.0
    %93 = vmatprep.subr.mxu0 0.0
    %94 = vmatpush2.msra.mxu0 0.0
    %95 = vmatprep.subr.mxu0 0.0
    %96 = vmatpush2.msra.mxu0 0.0
    %97 = vmatprep.subr.mxu0 0.0
    %98 = vmatpush2.msra.mxu0 0.0
    %99 = vmatprep.subr.mxu0 0.0
    %100 = vmatpush2.msra.mxu0 0.0
    %101 = vmatprep.subr.mxu0 0.0
    %102 = vmatpush2.msra.mxu0 0.0
    %103 = vmatprep.subr.mxu0 0.0
    %104 = vmatpush2.msra.mxu0 0.0
    %105 = vmatprep.mubr.f32.mxu0 0.0
    %106 = vmatmul.mubr.f32.gmra.mxu0 %v36
    %v107 = vpop.f32.mrf.mxu0
    %v108 = vadd.f32 %v32, %v107
    %v109 = vpop.f32.mrf.mxu0
    %110 = vmatprep.mubr.f32.mxu0 0.0
    %111 = vmatmul.mubr.f32.gmra.mxu0 %v39
    %v112 = vpop.f32.mrf.mxu0
    %v113 = vadd.f32 %v32, %v112
    %v114 = vpop.f32.mrf.mxu0
    %115 = vdwg.mxu0
    %v116 = vmax.f32 %v108, 0.0
    %v117 = vmax.f32 %v113, 0.0
    %v118 = vld [vmem:[%s3] sm:$0xff]
    %v119 = vld [vmem:[%s4] sm:$0x1]
    %v121 = vlaneseq
    %v122 = vshrl.u32 %v121, 7
    %v123 = vsub.s32 0, %v122
    %v124 = vrot.slane %v119, %v123
    %vm126 = vcmask 64512
    %v128 = vsel %vm126, %v116, 0
    %v131 = vsel %vm126, %v117, 0
    %133 = vmatprep.subr.mxu0 0.0
    %134 = vmatpush1.msra.mxu0 0.0
    %135 = vmatprep.subr.mxu0 0.0
    %136 = vmatpush1.msra.mxu0 0.0
    %137 = vmatprep.subr.mxu0 0.0
    %138 = vmatpush1.msra.mxu0 0.0
    %139 = vmatprep.subr.mxu0 0.0
    %140 = vmatpush1.msra.mxu0 0.0
    %141 = vmatprep.subr.mxu0 0.0
    %142 = vmatpush1.msra.mxu0 0.0
    %143 = vmatprep.subr.mxu0 0.0
    %144 = vmatpush1.msra.mxu0 0.0
    %145 = vmatprep.subr.mxu0 0.0
    %146 = vmatpush1.msra.mxu0 0.0
    %147 = vmatprep.subr.mxu0 0.0
    %148 = vmatpush1.msra.mxu0 0.0
    %149 = vmatprep.subr.mxu0 0.0
    %150 = vmatpush1.msra.mxu0 0.0
    %151 = vmatprep.subr.mxu0 0.0
    %152 = vmatpush1.msra.mxu0 0.0
    %153 = vmatprep.subr.mxu0 0.0
    %154 = vmatpush1.msra.mxu0 0.0
    %155 = vmatprep.subr.mxu0 0.0
    %156 = vmatpush1.msra.mxu0 0.0
    %157 = vmatprep.subr.mxu0 0.0
    %158 = vmatpush1.msra.mxu0 0.0
    %159 = vmatprep.subr.mxu0 0.0
    %160 = vmatpush1.msra.mxu0 0.0
    %161 = vmatprep.subr.mxu0 0.0
    %162 = vmatpush1.msra.mxu0 0.0
    %163 = vmatprep.subr.mxu0 0.0
    %164 = vmatpush1.msra.mxu0 %v118
    %165 = vmatprep.subr.mxu0 0.0
    %166 = vmatpush2.msra.mxu0 0.0
    %167 = vmatprep.subr.mxu0 0.0
    %168 = vmatpush2.msra.mxu0 0.0
    %169 = vmatprep.subr.mxu0 0.0
    %170 = vmatpush2.msra.mxu0 0.0
    %171 = vmatprep.subr.mxu0 0.0
    %172 = vmatpush2.msra.mxu0 0.0
    %173 = vmatprep.subr.mxu0 0.0
    %174 = vmatpush2.msra.mxu0 0.0
    %175 = vmatprep.subr.mxu0 0.0
    %176 = vmatpush2.msra.mxu0 0.0
    %177 = vmatprep.subr.mxu0 0.0
    %178 = vmatpush2.msra.mxu0 0.0
    %179 = vmatprep.subr.mxu0 0.0
    %180 = vmatpush2.msra.mxu0 0.0
    %181 = vmatprep.subr.mxu0 0.0
    %182 = vmatpush2.msra.mxu0 0.0
    %183 = vmatprep.subr.mxu0 0.0
    %184 = vmatpush2.msra.mxu0 0.0
    %185 = vmatprep.subr.mxu0 0.0
    %186 = vmatpush2.msra.mxu0 0.0
    %187 = vmatprep.subr.mxu0 0.0
    %188 = vmatpush2.msra.mxu0 0.0
    %189 = vmatprep.subr.mxu0 0.0
    %190 = vmatpush2.msra.mxu0 0.0
    %191 = vmatprep.subr.mxu0 0.0
    %192 = vmatpush2.msra.mxu0 0.0
    %193 = vmatprep.subr.mxu0 0.0
    %194 = vmatpush2.msra.mxu0 0.0
    %195 = vmatprep.subr.mxu0 0.0
    %196 = vmatpush2.msra.mxu0 0.0
    %197 = vmatprep.mubr.f32.mxu0 0.0
    %198 = vmatmul.mubr.f32.gmra.mxu0 %v128
    %v199 = vpop.f32.mrf.mxu0
    %v200 = vadd.f32 %v124, %v199
    %v201 = vpop.f32.mrf.mxu0
    %202 = vmatprep.mubr.f32.mxu0 0.0
    %203 = vmatmul.mubr.f32.gmra.mxu0 %v131
    %v204 = vpop.f32.mrf.mxu0
    %v205 = vadd.f32 %v124, %v204
    %v206 = vpop.f32.mrf.mxu0
    %207 = vdwg.mxu0
    %v208 = vxor.u32 %v200, 2147483648
    %v209 = vxor.u32 %v205, 2147483648
    %v210 = vmul.f32 %v208, 1.442695
    %v211 = vpow.pop %v210
    %v212 = vmul.f32 %v209, 1.442695
    %v213 = vpow.pop %v212
    %v214 = vadd.f32 %v211, 1.0
    %v215 = vadd.f32 %v213, 1.0
    %v216 = vrcp.pop %v214
    %v217 = vmul.f32 1.0, %v216
    %v218 = vrcp.pop %v215
    %v219 = vmul.f32 1.0, %v218
    %220 = vst.msk [vmem:[#allocation2] sm:$0xff] %vm34, %v217
    %221 = vst.msk [vmem:[#allocation2 + $0x8] sm:$0xff] %vm34, %v219
    // Predicated region
    $region22: #{tpu_custom_call.1} parent=1 // pred_check
      _
    $region23: #{tpu_custom_call.1} parent=1 // pred_check_branch
      %223 = sbr.rel (0) target = $region25
    $region24: #{tpu_custom_call.1} parent=1 // pred_region
      %s225 = ssub.s32 256, 256
      %226 = vsyncadd [#allocation3], %s225
      %s227 = sshll.u32 [#allocation2], 4
      %s228 = int_to_ptr.vmem [resolvable:$true] %s227
      %233 = dma.vmem_to_hbm [thread:$0]  %s228, 256, %s5, [#allocation3], 128, 128, 8
    $region25: #{tpu_custom_call.1} parent=1 // pred_fallthru
      _
    // Predicated region
    $region26: #{tpu_custom_call.1} parent=1 // pred_check
      _
    $region27: #{tpu_custom_call.1} parent=1 // pred_check_branch
      %235 = sbr.rel (0) target = $region29
    $region28: #{tpu_custom_call.1} parent=1 // pred_region
      %236 = dma.done [#allocation3], 256
    $region29: #{tpu_custom_call.1} parent=1 // pred_fallthru
      _
    %237 = vsyncpa [#allocation3], 1

// kernel: tpu_custom_call.1
$region0: #{tpu_custom_call.1}
  #allocation0 [shape = 'u32[]', space=smem, size = 0x4, offset = 0x4, fixed_abs, tag = 'smem constant byte address 0x4 - core index']
  #allocation1 [shape = 'u32[144,128]{1,0:T(1,128)}', space=vmem, size = 0x12000, scoped, tag = 'internal scratch']
  %s0 = inlined_call_operand.vmem [shape: f32[16,32], index: 0, kind: input, shape index: {}]
  %s1 = inlined_call_operand.vmem [shape: f32[32,8], index: 1, kind: input, shape index: {}]
  %s2 = inlined_call_operand.vmem [shape: f32[1,8], index: 2, kind: input, shape index: {}]
  %s3 = inlined_call_operand.vmem [shape: f32[8,32], index: 3, kind: input, shape index: {}]
  %s4 = inlined_call_operand.vmem [shape: f32[1,32], index: 4, kind: input, shape index: {}]
  %s5 = inlined_call_operand.hbm [shape: f32[16,32], index: 5, kind: output, shape index: {}]
  %s6 = sld [smem:[#allocation0]]
  $region30: #{tpu_custom_call.1} parent=0
    _
  %s8 = ssub.s32 1, %s6
  %s9 = scalar_select 0, %s8, %s6
  $region1: #{tpu_custom_call.1} parent=0
    #allocation2 [shape = 'u8[8192]{0}', space=vmem, size = 0x2000, scoped, tag = 'output window, operand 0, single buffered']
    #allocation3 [shape = 's32[1]{0}', space=sflag, size = 0x4, scoped, tag = 'scoped memory for tpu_custom_call.1']
    %10 = vsyncpa [#allocation3], 0
    // Predicated region
    $region2: #{tpu_custom_call.1} parent=1 // pred_check
      _
    $region3: #{tpu_custom_call.1} parent=1 // pred_check_branch
      %12 = sbr.rel (0) target = $region5
    $region4: #{tpu_custom_call.1} parent=1 // pred_region
      _
    $region5: #{tpu_custom_call.1} parent=1 // pred_fallthru
      _
    // Predicated region
    $region6: #{tpu_custom_call.1} parent=1 // pred_check
      _
    $region7: #{tpu_custom_call.1} parent=1 // pred_check_branch
      %14 = sbr.rel (0) target = $region9
    $region8: #{tpu_custom_call.1} parent=1 // pred_region
      _
    $region9: #{tpu_custom_call.1} parent=1 // pred_fallthru
      _
    // Predicated region
    $region10: #{tpu_custom_call.1} parent=1 // pred_check
      _
    $region11: #{tpu_custom_call.1} parent=1 // pred_check_branch
      %16 = sbr.rel (0) target = $region13
    $region12: #{tpu_custom_call.1} parent=1 // pred_region
      _
    $region13: #{tpu_custom_call.1} parent=1 // pred_fallthru
      _
    // Predicated region
    $region14: #{tpu_custom_call.1} parent=1 // pred_check
      _
    $region15: #{tpu_custom_call.1} parent=1 // pred_check_branch
      %18 = sbr.rel (0) target = $region17
    $region16: #{tpu_custom_call.1} parent=1 // pred_region
      _
    $region17: #{tpu_custom_call.1} parent=1 // pred_fallthru
      _
    // Predicated region
    $region18: #{tpu_custom_call.1} parent=1 // pred_check
      _
    $region19: #{tpu_custom_call.1} parent=1 // pred_check_branch
      %20 = sbr.rel (0) target = $region21
    $region20: #{tpu_custom_call.1} parent=1 // pred_region
      _
    $region21: #{tpu_custom_call.1} parent=1 // pred_fallthru
      _
    %v21 = vld [vmem:[%s0] sm:$0xff]
    %v22 = vld [vmem:[%s0 + $0x8] sm:$0xff]
    %v23 = vld [vmem:[%s1] sm:$0xff]
    %v24 = vld [vmem:[%s1 + $0x8] sm:$0xff]
    %v25 = vld [vmem:[%s1 + $0x10] sm:$0xff]
    %v26 = vld [vmem:[%s1 + $0x18] sm:$0xff]
    %v27 = vld [vmem:[%s2] sm:$0x1]
    %v29 = vlaneseq
    %v30 = vshrl.u32 %v29, 7
    %v31 = vsub.s32 0, %v30
    %v32 = vrot.slane %v27, %v31
    %vm34 = vcmask 261120
    %v36 = vsel %vm34, %v21, 0
    %v39 = vsel %vm34, %v22, 0
    %41 = vmatprep.subr.mxu0 0.0
    %42 = vmatpush1.msra.mxu0 0.0
    %43 = vmatprep.subr.mxu0 0.0
    %44 = vmatpush1.msra.mxu0 0.0
    %45 = vmatprep.subr.mxu0 0.0
    %46 = vmatpush1.msra.mxu0 0.0
    %47 = vmatprep.subr.mxu0 0.0
    %48 = vmatpush1.msra.mxu0 0.0
    %49 = vmatprep.subr.mxu0 0.0
    %50 = vmatpush1.msra.mxu0 0.0
    %51 = vmatprep.subr.mxu0 0.0
    %52 = vmatpush1.msra.mxu0 0.0
    %53 = vmatprep.subr.mxu0 0.0
    %54 = vmatpush1.msra.mxu0 0.0
    %55 = vmatprep.subr.mxu0 0.0
    %56 = vmatpush1.msra.mxu0 0.0
    %57 = vmatprep.subr.mxu0 0.0
    %58 = vmatpush1.msra.mxu0 0.0
    %59 = vmatprep.subr.mxu0 0.0
    %60 = vmatpush1.msra.mxu0 0.0
    %61 = vmatprep.subr.mxu0 0.0
    %62 = vmatpush1.msra.mxu0 0.0
    %63 = vmatprep.subr.mxu0 0.0
    %64 = vmatpush1.msra.mxu0 0.0
    %65 = vmatprep.subr.mxu0 0.0
    %66 = vmatpush1.msra.mxu0 %v26
    %67 = vmatprep.subr.mxu0 0.0
    %68 = vmatpush1.msra.mxu0 %v25
    %69 = vmatprep.subr.mxu0 0.0
    %70 = vmatpush1.msra.mxu0 %v24
    %71 = vmatprep.subr.mxu0 0.0
    %72 = vmatpush1.msra.mxu0 %v23
    %73 = vmatprep.subr.mxu0 0.0
    %74 = vmatpush2.msra.mxu0 0.0
    %75 = vmatprep.subr.mxu0 0.0
    %76 = vmatpush2.msra.mxu0 0.0
    %77 = vmatprep.subr.mxu0 0.0
    %78 = vmatpush2.msra.mxu0 0.0
    %79 = vmatprep.subr.mxu0 0.0
    %80 = vmatpush2.msra.mxu0 0.0
    %81 = vmatprep.subr.mxu0 0.0
    %82 = vmatpush2.msra.mxu0 0.0
    %83 = vmatprep.subr.mxu0 0.0
    %84 = vmatpush2.msra.mxu0 0.0
    %85 = vmatprep.subr.mxu0 0.0
    %86 = vmatpush2.msra.mxu0 0.0
    %87 = vmatprep.subr.mxu0 0.0
    %88 = vmatpush2.msra.mxu0 0.0
    %89 = vmatprep.subr.mxu0 0.0
    %90 = vmatpush2.msra.mxu0 0.0
    %91 = vmatprep.subr.mxu0 0.0
    %92 = vmatpush2.msra.mxu0 0.0
    %93 = vmatprep.subr.mxu0 0.0
    %94 = vmatpush2.msra.mxu0 0.0
    %95 = vmatprep.subr.mxu0 0.0
    %96 = vmatpush2.msra.mxu0 0.0
    %97 = vmatprep.subr.mxu0 0.0
    %98 = vmatpush2.msra.mxu0 0.0
    %99 = vmatprep.subr.mxu0 0.0
    %100 = vmatpush2.msra.mxu0 0.0
    %101 = vmatprep.subr.mxu0 0.0
    %102 = vmatpush2.msra.mxu0 0.0
    %103 = vmatprep.subr.mxu0 0.0
    %104 = vmatpush2.msra.mxu0 0.0
    %105 = vmatprep.mubr.f32.mxu0 0.0
    %106 = vmatmul.mubr.f32.gmra.mxu0 %v36
    %v107 = vpop.f32.mrf.mxu0
    %v108 = vadd.f32 %v32, %v107
    %v109 = vpop.f32.mrf.mxu0
    %110 = vmatprep.mubr.f32.mxu0 0.0
    %111 = vmatmul.mubr.f32.gmra.mxu0 %v39
    %v112 = vpop.f32.mrf.mxu0
    %v113 = vadd.f32 %v32, %v112
    %v114 = vpop.f32.mrf.mxu0
    %115 = vdwg.mxu0
    %v116 = vmax.f32 %v108, 0.0
    %v117 = vmax.f32 %v113, 0.0
    %v118 = vld [vmem:[%s3] sm:$0xff]
    %v119 = vld [vmem:[%s4] sm:$0x1]
    %v121 = vlaneseq
    %v122 = vshrl.u32 %v121, 7
    %v123 = vsub.s32 0, %v122
    %v124 = vrot.slane %v119, %v123
    %vm126 = vcmask 64512
    %v128 = vsel %vm126, %v116, 0
    %v131 = vsel %vm126, %v117, 0
    %133 = vmatprep.subr.mxu0 0.0
    %134 = vmatpush1.msra.mxu0 0.0
    %135 = vmatprep.subr.mxu0 0.0
    %136 = vmatpush1.msra.mxu0 0.0
    %137 = vmatprep.subr.mxu0 0.0
    %138 = vmatpush1.msra.mxu0 0.0
    %139 = vmatprep.subr.mxu0 0.0
    %140 = vmatpush1.msra.mxu0 0.0
    %141 = vmatprep.subr.mxu0 0.0
    %142 = vmatpush1.msra.mxu0 0.0
    %143 = vmatprep.subr.mxu0 0.0
    %144 = vmatpush1.msra.mxu0 0.0
    %145 = vmatprep.subr.mxu0 0.0
    %146 = vmatpush1.msra.mxu0 0.0
    %147 = vmatprep.subr.mxu0 0.0
    %148 = vmatpush1.msra.mxu0 0.0
    %149 = vmatprep.subr.mxu0 0.0
    %150 = vmatpush1.msra.mxu0 0.0
    %151 = vmatprep.subr.mxu0 0.0
    %152 = vmatpush1.msra.mxu0 0.0
    %153 = vmatprep.subr.mxu0 0.0
    %154 = vmatpush1.msra.mxu0 0.0
    %155 = vmatprep.subr.mxu0 0.0
    %156 = vmatpush1.msra.mxu0 0.0
    %157 = vmatprep.subr.mxu0 0.0
    %158 = vmatpush1.msra.mxu0 0.0
    %159 = vmatprep.subr.mxu0 0.0
    %160 = vmatpush1.msra.mxu0 0.0
    %161 = vmatprep.subr.mxu0 0.0
    %162 = vmatpush1.msra.mxu0 0.0
    %163 = vmatprep.subr.mxu0 0.0
    %164 = vmatpush1.msra.mxu0 %v118
    %165 = vmatprep.subr.mxu0 0.0
    %166 = vmatpush2.msra.mxu0 0.0
    %167 = vmatprep.subr.mxu0 0.0
    %168 = vmatpush2.msra.mxu0 0.0
    %169 = vmatprep.subr.mxu0 0.0
    %170 = vmatpush2.msra.mxu0 0.0
    %171 = vmatprep.subr.mxu0 0.0
    %172 = vmatpush2.msra.mxu0 0.0
    %173 = vmatprep.subr.mxu0 0.0
    %174 = vmatpush2.msra.mxu0 0.0
    %175 = vmatprep.subr.mxu0 0.0
    %176 = vmatpush2.msra.mxu0 0.0
    %177 = vmatprep.subr.mxu0 0.0
    %178 = vmatpush2.msra.mxu0 0.0
    %179 = vmatprep.subr.mxu0 0.0
    %180 = vmatpush2.msra.mxu0 0.0
    %181 = vmatprep.subr.mxu0 0.0
    %182 = vmatpush2.msra.mxu0 0.0
    %183 = vmatprep.subr.mxu0 0.0
    %184 = vmatpush2.msra.mxu0 0.0
    %185 = vmatprep.subr.mxu0 0.0
    %186 = vmatpush2.msra.mxu0 0.0
    %187 = vmatprep.subr.mxu0 0.0
    %188 = vmatpush2.msra.mxu0 0.0
    %189 = vmatprep.subr.mxu0 0.0
    %190 = vmatpush2.msra.mxu0 0.0
    %191 = vmatprep.subr.mxu0 0.0
    %192 = vmatpush2.msra.mxu0 0.0
    %193 = vmatprep.subr.mxu0 0.0
    %194 = vmatpush2.msra.mxu0 0.0
    %195 = vmatprep.subr.mxu0 0.0
    %196 = vmatpush2.msra.mxu0 0.0
    %197 = vmatprep.mubr.f32.mxu0 0.0
    %198 = vmatmul.mubr.f32.gmra.mxu0 %v128
    %v199 = vpop.f32.mrf.mxu0
    %v200 = vadd.f32 %v124, %v199
    %v201 = vpop.f32.mrf.mxu0
    %202 = vmatprep.mubr.f32.mxu0 0.0
    %203 = vmatmul.mubr.f32.gmra.mxu0 %v131
    %v204 = vpop.f32.mrf.mxu0
    %v205 = vadd.f32 %v124, %v204
    %v206 = vpop.f32.mrf.mxu0
    %207 = vdwg.mxu0
    %v208 = vxor.u32 %v200, 2147483648
    %v209 = vxor.u32 %v205, 2147483648
    %v210 = vmul.f32 %v208, 1.442695
    %v211 = vpow.pop %v210
    %v212 = vmul.f32 %v209, 1.442695
    %v213 = vpow.pop %v212
    %v214 = vadd.f32 %v211, 1.0
    %v215 = vadd.f32 %v213, 1.0
    %v216 = vrcp.pop %v214
    %v217 = vmul.f32 1.0, %v216
    %v218 = vrcp.pop %v215
    %v219 = vmul.f32 1.0, %v218
    %220 = vst.msk [vmem:[#allocation2] sm:$0xff] %vm34, %v217
    %221 = vst.msk [vmem:[#allocation2 + $0x8] sm:$0xff] %vm34, %v219
    // Predicated region
    $region22: #{tpu_custom_call.1} parent=1 // pred_check
      _
    $region23: #{tpu_custom_call.1} parent=1 // pred_check_branch
      %223 = sbr.rel (0) target = $region25
    $region24: #{tpu_custom_call.1} parent=1 // pred_region
      %s225 = ssub.s32 256, 256
      %226 = vsyncadd [#allocation3], %s225
      %s227 = sshll.u32 [#allocation2], 4
      %s228 = int_to_ptr.vmem [resolvable:$true] %s227
      %233 = dma.vmem_to_hbm [thread:$0]  %s228, 256, %s5, [#allocation3], 128, 128, 8
    $region25: #{tpu_custom_call.1} parent=1 // pred_fallthru
      _
    // Predicated region
    $region26: #{tpu_custom_call.1} parent=1 // pred_check
      _
    $region27: #{tpu_custom_call.1} parent=1 // pred_check_branch
      %235 = sbr.rel (0) target = $region29
    $region28: #{tpu_custom_call.1} parent=1 // pred_region
      %236 = dma.done [#allocation3], 256
    $region29: #{tpu_custom_call.1} parent=1 // pred_fallthru
      _
    %237 = vsyncpa [#allocation3], 1

</llo_original>
